<compile_context>
chip_gen: v7x
topology: tpu7x:2x2x1
jax: 0.10.0
libtpu: 0.0.40
codegen_flags: <defaults>
</compile_context>

<pallas_src>
import functools

import jax
import jax.numpy as jnp
from jax.experimental import pallas as pl
from jax.experimental.pallas import tpu as pltpu


def _round_up(n, m):
    return ((n + m - 1) // m) * m


def _fc_kernel(x_ref, w1_ref, b1_ref, w2_ref, b2_ref,
               gamma_ref, beta_ref, wf_ref, bf_ref, o_ref, *, d_real, d_pad):
    x = x_ref[...]                                             # [TB, Dp] f32

    # residual block: linear1 -> relu -> linear2 (bf16 MXU inputs, f32 acc)
    h = jnp.dot(x.astype(jnp.bfloat16), w1_ref[...],
                preferred_element_type=jnp.float32) + b1_ref[...]
    h = jnp.maximum(h, 0.0)                                    # [TB, Hp]
    r = jnp.dot(h.astype(jnp.bfloat16), w2_ref[...],
                preferred_element_type=jnp.float32) + b2_ref[...]

    # LayerNorm(x + r) over the real feature width d_real (eps = 1e-5).
    # Padded feature lanes of x and r are exactly zero, so plain lane sums
    # are correct for the mean; center is masked for the variance.
    s = x + r                                                  # [TB, Dp]
    inv_d = 1.0 / d_real
    mean = jnp.sum(s, axis=-1, keepdims=True) * inv_d
    cent = s - mean
    if d_real != d_pad:
        lane = jax.lax.broadcasted_iota(jnp.int32, s.shape, 1)
        cent = jnp.where(lane < d_real, cent, 0.0)
    var = jnp.sum(cent * cent, axis=-1, keepdims=True) * inv_d
    inv = jax.lax.rsqrt(var + 1e-5)
    y = cent * (inv * gamma_ref[...]) + beta_ref[...]          # [TB, Dp]

    # final projection
    o_ref[...] = (jnp.dot(y.astype(jnp.bfloat16), wf_ref[...],
                          preferred_element_type=jnp.float32)
                  + bf_ref[...])                               # [TB, Op]


def _pad2(a, rows, cols, dtype):
    out = jnp.zeros((rows, cols), dtype)
    return out.at[:a.shape[0], :a.shape[1]].set(a.astype(dtype))


def fully_connected_forward(x, params):
    """x: [B, D] float32. params: dict of weights (see init_params)."""
    B, D = x.shape
    H = params["w1"].shape[1]           # 2 * D
    O = params["wf"].shape[1]

    # Lane/MXU-aligned padded dims.
    Dp = _round_up(D, 128)
    Hp = _round_up(H, 128)
    Op = _round_up(O, 128)

    # Batch tile: 256 for large batches (matches v6e/v7x 256-wide MXU;
    # still fine on v5e), otherwise the whole (sublane-rounded) batch.
    TB = 256 if B > 256 else _round_up(max(B, 1), 8)
    Bp = _round_up(B, TB)
    grid = (Bp // TB,)

    # Zero-pad activations; weights pre-cast to bf16, biases/affine in f32.
    xp = _pad2(x, Bp, Dp, jnp.float32)
    w1 = _pad2(params["w1"], Dp, Hp, jnp.bfloat16)
    b1 = _pad2(params["b1"], 1, Hp, jnp.float32)
    w2 = _pad2(params["w2"], Hp, Dp, jnp.bfloat16)
    b2 = _pad2(params["b2"], 1, Dp, jnp.float32)
    gamma = _pad2(params["gamma"], 1, Dp, jnp.float32)
    beta = _pad2(params["beta"], 1, Dp, jnp.float32)
    wf = _pad2(params["wf"], Dp, Op, jnp.bfloat16)
    bf = _pad2(params["bf"], 1, Op, jnp.float32)

    # VMEM budget: resident (double-buffered) weights + biases, pipelined
    # x/out tiles, in-kernel intermediates, plus headroom.
    bytes_w = 2 * (Dp * Hp + Hp * Dp + Dp * Op) * 2            # bf16 weights
    bytes_b = 2 * (Hp + 3 * Dp + Op) * 4
    bytes_io = 2 * TB * (Dp + Op) * 4                          # x / out tiles
    bytes_tmp = TB * (Hp + 4 * Dp + Op) * 4                    # h, s, y, casts
    vmem_limit = bytes_w + bytes_b + bytes_io + bytes_tmp + (4 << 20)
    vmem_limit = int(min(max(vmem_limit, 32 << 20), 128 << 20))

    flops = 2 * Bp * (Dp * Hp + Hp * Dp + Dp * Op)
    bytes_accessed = (Bp * Dp * 4 + Bp * Op * 4
                      + 2 * (Dp * Hp + Hp * Dp + Dp * Op)
                      + (Hp + 3 * Dp + Op) * 4)
    cost = pl.CostEstimate(flops=flops, transcendentals=Bp,
                           bytes_accessed=bytes_accessed)

    resident = lambda shape: pl.BlockSpec(shape, lambda i: (0, 0))
    kernel = functools.partial(_fc_kernel, d_real=D, d_pad=Dp)

    out = pl.pallas_call(
        kernel,
        out_shape=jax.ShapeDtypeStruct((Bp, Op), jnp.float32),
        grid=grid,
        in_specs=[
            pl.BlockSpec((TB, Dp), lambda i: (i, 0)),          # x (pipelined)
            resident((Dp, Hp)),                                # w1
            resident((1, Hp)),                                 # b1
            resident((Hp, Dp)),                                # w2
            resident((1, Dp)),                                 # b2
            resident((1, Dp)),                                 # gamma
            resident((1, Dp)),                                 # beta
            resident((Dp, Op)),                                # wf
            resident((1, Op)),                                 # bf
        ],
        out_specs=pl.BlockSpec((TB, Op), lambda i: (i, 0)),
        compiler_params=pltpu.CompilerParams(
            dimension_semantics=("parallel",),
            vmem_limit_bytes=vmem_limit),
        cost_estimate=cost,
    )(xp, w1, b1, w2, b2, gamma, beta, wf, bf)

    return out[:B, :O]


def init_params(key, d_input, out):
    """Deterministic parameter init (PyTorch-style uniform ranges)."""
    D, H = d_input, 2 * d_input
    ks = jax.random.split(key, 6)

    def uni(k, shape, fan_in):
        bound = 1.0 / jnp.sqrt(fan_in)
        return jax.random.uniform(k, shape, jnp.float32, -bound, bound)

    return {
        # stored as [in, out] so the kernel does x @ W
        "w1": uni(ks[0], (D, H), D),
        "b1": uni(ks[1], (1, H), D),
        "w2": uni(ks[2], (H, D), H),
        "b2": uni(ks[3], (1, D), H),
        "gamma": jnp.ones((1, D), jnp.float32),
        "beta": jnp.zeros((1, D), jnp.float32),
        "wf": uni(ks[4], (D, out), D),
        "bf": uni(ks[5], (1, out), D),
    }


def _reference(x, p):
    """Plain-JAX f32 reference of the same forward pass."""
    h = jnp.maximum(x @ p["w1"] + p["b1"], 0.0)
    r = h @ p["w2"] + p["b2"]
    s = x + r
    mean = jnp.mean(s, axis=-1, keepdims=True)
    var = jnp.mean((s - mean) ** 2, axis=-1, keepdims=True)
    y = (s - mean) / jnp.sqrt(var + 1e-5) * p["gamma"] + p["beta"]
    return y @ p["wf"] + p["bf"]


if __name__ == "__main__":
    key = jax.random.PRNGKey(0)
    k_x, k_p = jax.random.split(key)

    B, D, OUT = 8, 32, 16              # batch=8, d_input=32, out=16
    x = jax.random.normal(k_x, (B, D), jnp.float32)
    params = init_params(k_p, D, OUT)

    fc = jax.jit(fully_connected_forward)
    out = jax.block_until_ready(fc(x, params))

    ref = _reference(x, params)
    assert out.shape == (B, OUT)
    # bf16 matmul inputs (f32 accumulation) -> small drift vs the f32 reference.
    assert jnp.allclose(out, ref, atol=3e-2, rtol=3e-2), "mismatch vs reference"

    print("KERNEL_OK")
</pallas_src>

<mosaic_0001>
module attributes {stable_mosaic.version = 11 : i64} {
  func.func @_fc_kernel(%arg0: i32, %arg1: memref<8x128xf32, #tpu.memory_space<vmem>>, %arg2: memref<128x128xbf16, #tpu.memory_space<vmem>>, %arg3: memref<1x128xf32, #tpu.memory_space<vmem>>, %arg4: memref<128x128xbf16, #tpu.memory_space<vmem>>, %arg5: memref<1x128xf32, #tpu.memory_space<vmem>>, %arg6: memref<1x128xf32, #tpu.memory_space<vmem>>, %arg7: memref<1x128xf32, #tpu.memory_space<vmem>>, %arg8: memref<128x128xbf16, #tpu.memory_space<vmem>>, %arg9: memref<1x128xf32, #tpu.memory_space<vmem>>, %arg10: memref<8x128xf32, #tpu.memory_space<vmem>>) attributes {dimension_semantics = [#tpu.dimension_semantics<parallel>], iteration_bounds = array<i64: 1>, scalar_prefetch = 0 : i64, scratch_operands = 0 : i64, tpu.core_type = #tpu.core_type<tc>, window_params = [{transform_indices = @transform_0, window_bounds = array<i64: 8, 128>}, {pipeline_mode = #tpu.pipeline_mode<synchronous>, transform_indices = @transform_1, window_bounds = array<i64: 128, 128>}, {pipeline_mode = #tpu.pipeline_mode<synchronous>, transform_indices = @transform_2, window_bounds = array<i64: 1, 128>}, {pipeline_mode = #tpu.pipeline_mode<synchronous>, transform_indices = @transform_3, window_bounds = array<i64: 128, 128>}, {pipeline_mode = #tpu.pipeline_mode<synchronous>, transform_indices = @transform_4, window_bounds = array<i64: 1, 128>}, {pipeline_mode = #tpu.pipeline_mode<synchronous>, transform_indices = @transform_5, window_bounds = array<i64: 1, 128>}, {pipeline_mode = #tpu.pipeline_mode<synchronous>, transform_indices = @transform_6, window_bounds = array<i64: 1, 128>}, {pipeline_mode = #tpu.pipeline_mode<synchronous>, transform_indices = @transform_7, window_bounds = array<i64: 128, 128>}, {pipeline_mode = #tpu.pipeline_mode<synchronous>, transform_indices = @transform_8, window_bounds = array<i64: 1, 128>}, {transform_indices = @transform_9, window_bounds = array<i64: 8, 128>}]} {
    %c0 = arith.constant 0 : index
    %c0_0 = arith.constant 0 : index
    %0 = vector.load %arg1[%c0, %c0_0] : memref<8x128xf32, #tpu.memory_space<vmem>>, vector<8x128xf32>
    %1 = arith.truncf %0 : vector<8x128xf32> to vector<8x128xbf16>
    %c0_1 = arith.constant 0 : index
    %c0_2 = arith.constant 0 : index
    %2 = vector.load %arg2[%c0_1, %c0_2] : memref<128x128xbf16, #tpu.memory_space<vmem>>, vector<128x128xbf16>
    %cst = arith.constant dense<0.000000e+00> : vector<8x128xf32>
    %3 = tpu.matmul %1, %2, %cst {dimension_numbers = #tpu.dot_dimension_numbers<[1], [0], [0], [1], [0, 0, 1, 1], [], []>} : vector<8x128xbf16>, vector<128x128xbf16>, vector<8x128xf32> -> vector<8x128xf32>
    %c0_3 = arith.constant 0 : index
    %c0_4 = arith.constant 0 : index
    %4 = vector.load %arg3[%c0_3, %c0_4] : memref<1x128xf32, #tpu.memory_space<vmem>>, vector<1x128xf32>
    %5 = vector.broadcast %4 : vector<1x128xf32> to vector<8x128xf32>
    %6 = arith.addf %3, %5 : vector<8x128xf32>
    %cst_5 = arith.constant 0.000000e+00 : f32
    %7 = vector.broadcast %cst_5 : f32 to vector<8x128xf32>
    %8 = arith.maximumf %6, %7 : vector<8x128xf32>
    %9 = arith.truncf %8 : vector<8x128xf32> to vector<8x128xbf16>
    %c0_6 = arith.constant 0 : index
    %c0_7 = arith.constant 0 : index
    %10 = vector.load %arg4[%c0_6, %c0_7] : memref<128x128xbf16, #tpu.memory_space<vmem>>, vector<128x128xbf16>
    %cst_8 = arith.constant dense<0.000000e+00> : vector<8x128xf32>
    %11 = tpu.matmul %9, %10, %cst_8 {dimension_numbers = #tpu.dot_dimension_numbers<[1], [0], [0], [1], [0, 0, 1, 1], [], []>} : vector<8x128xbf16>, vector<128x128xbf16>, vector<8x128xf32> -> vector<8x128xf32>
    %c0_9 = arith.constant 0 : index
    %c0_10 = arith.constant 0 : index
    %12 = vector.load %arg5[%c0_9, %c0_10] : memref<1x128xf32, #tpu.memory_space<vmem>>, vector<1x128xf32>
    %13 = vector.broadcast %12 : vector<1x128xf32> to vector<8x128xf32>
    %14 = arith.addf %11, %13 : vector<8x128xf32>
    %15 = arith.addf %0, %14 : vector<8x128xf32>
    %cst_11 = arith.constant dense<0.000000e+00> : vector<8xf32>
    %16 = vector.multi_reduction <add>, %15, %cst_11 [1] : vector<8x128xf32> to vector<8xf32>
    %17 = vector.shape_cast %16 : vector<8xf32> to vector<8x1xf32>
    %cst_12 = arith.constant 3.125000e-02 : f32
    %18 = vector.broadcast %cst_12 : f32 to vector<8x1xf32>
    %19 = arith.mulf %17, %18 : vector<8x1xf32>
    %20 = vector.broadcast %19 : vector<8x1xf32> to vector<8x128xf32>
    %21 = arith.subf %15, %20 : vector<8x128xf32>
    %22 = tpu.iota {dimensions = array<i32: 1>} : vector<8x128xi32>
    %c32_i32 = arith.constant 32 : i32
    %23 = vector.broadcast %c32_i32 : i32 to vector<8x128xi32>
    %24 = arith.cmpi slt, %22, %23 : vector<8x128xi32>
    %cst_13 = arith.constant 0.000000e+00 : f32
    %25 = vector.broadcast %cst_13 : f32 to vector<8x128xf32>
    %26 = arith.select %24, %21, %25 : vector<8x128xi1>, vector<8x128xf32>
    %27 = arith.mulf %26, %26 : vector<8x128xf32>
    %cst_14 = arith.constant dense<0.000000e+00> : vector<8xf32>
    %28 = vector.multi_reduction <add>, %27, %cst_14 [1] : vector<8x128xf32> to vector<8xf32>
    %29 = vector.shape_cast %28 : vector<8xf32> to vector<8x1xf32>
    %cst_15 = arith.constant 3.125000e-02 : f32
    %30 = vector.broadcast %cst_15 : f32 to vector<8x1xf32>
    %31 = arith.mulf %29, %30 : vector<8x1xf32>
    %cst_16 = arith.constant 9.99999974E-6 : f32
    %32 = vector.broadcast %cst_16 : f32 to vector<8x1xf32>
    %33 = arith.addf %31, %32 : vector<8x1xf32>
    %34 = math.rsqrt %33 : vector<8x1xf32>
    %c0_17 = arith.constant 0 : index
    %c0_18 = arith.constant 0 : index
    %35 = vector.load %arg6[%c0_17, %c0_18] : memref<1x128xf32, #tpu.memory_space<vmem>>, vector<1x128xf32>
    %36 = vector.broadcast %34 : vector<8x1xf32> to vector<8x128xf32>
    %37 = vector.broadcast %35 : vector<1x128xf32> to vector<8x128xf32>
    %38 = arith.mulf %36, %37 : vector<8x128xf32>
    %39 = arith.mulf %26, %38 : vector<8x128xf32>
    %c0_19 = arith.constant 0 : index
    %c0_20 = arith.constant 0 : index
    %40 = vector.load %arg7[%c0_19, %c0_20] : memref<1x128xf32, #tpu.memory_space<vmem>>, vector<1x128xf32>
    %41 = vector.broadcast %40 : vector<1x128xf32> to vector<8x128xf32>
    %42 = arith.addf %39, %41 : vector<8x128xf32>
    %43 = arith.truncf %42 : vector<8x128xf32> to vector<8x128xbf16>
    %c0_21 = arith.constant 0 : index
    %c0_22 = arith.constant 0 : index
    %44 = vector.load %arg8[%c0_21, %c0_22] : memref<128x128xbf16, #tpu.memory_space<vmem>>, vector<128x128xbf16>
    %cst_23 = arith.constant dense<0.000000e+00> : vector<8x128xf32>
    %45 = tpu.matmul %43, %44, %cst_23 {dimension_numbers = #tpu.dot_dimension_numbers<[1], [0], [0], [1], [0, 0, 1, 1], [], []>} : vector<8x128xbf16>, vector<128x128xbf16>, vector<8x128xf32> -> vector<8x128xf32>
    %c0_24 = arith.constant 0 : index
    %c0_25 = arith.constant 0 : index
    %46 = vector.load %arg9[%c0_24, %c0_25] : memref<1x128xf32, #tpu.memory_space<vmem>>, vector<1x128xf32>
    %47 = vector.broadcast %46 : vector<1x128xf32> to vector<8x128xf32>
    %48 = arith.addf %45, %47 : vector<8x128xf32>
    %c0_26 = arith.constant 0 : index
    %c0_27 = arith.constant 0 : index
    %49 = vector.load %arg10[%c0_26, %c0_27] : memref<8x128xf32, #tpu.memory_space<vmem>>, vector<8x128xf32>
    tpu.vector_store %arg10[%c0_26, %c0_27], %48 {strides = array<i32>} : memref<8x128xf32, #tpu.memory_space<vmem>>, vector<8x128xf32>,
    return
  }
  func.func @transform_0(%arg0: i32) -> (i32, i32) {
    %c0_i32 = arith.constant 0 : i32
    %c0_i32_0 = arith.constant 0 : i32
    return %arg0, %c0_i32 : i32, i32
  }
  func.func @transform_1(%arg0: i32) -> (i32, i32) {
    %c0_i32 = arith.constant 0 : i32
    %c0_i32_0 = arith.constant 0 : i32
    %c0_i32_1 = arith.constant 0 : i32
    return %c0_i32, %c0_i32_0 : i32, i32
  }
  func.func @transform_2(%arg0: i32) -> (i32, i32) {
    %c0_i32 = arith.constant 0 : i32
    %c0_i32_0 = arith.constant 0 : i32
    %c0_i32_1 = arith.constant 0 : i32
    return %c0_i32, %c0_i32_0 : i32, i32
  }
  func.func @transform_3(%arg0: i32) -> (i32, i32) {
    %c0_i32 = arith.constant 0 : i32
    %c0_i32_0 = arith.constant 0 : i32
    %c0_i32_1 = arith.constant 0 : i32
    return %c0_i32, %c0_i32_0 : i32, i32
  }
  func.func @transform_4(%arg0: i32) -> (i32, i32) {
    %c0_i32 = arith.constant 0 : i32
    %c0_i32_0 = arith.constant 0 : i32
    %c0_i32_1 = arith.constant 0 : i32
    return %c0_i32, %c0_i32_0 : i32, i32
  }
  func.func @transform_5(%arg0: i32) -> (i32, i32) {
    %c0_i32 = arith.constant 0 : i32
    %c0_i32_0 = arith.constant 0 : i32
    %c0_i32_1 = arith.constant 0 : i32
    return %c0_i32, %c0_i32_0 : i32, i32
  }
  func.func @transform_6(%arg0: i32) -> (i32, i32) {
    %c0_i32 = arith.constant 0 : i32
    %c0_i32_0 = arith.constant 0 : i32
    %c0_i32_1 = arith.constant 0 : i32
    return %c0_i32, %c0_i32_0 : i32, i32
  }
  func.func @transform_7(%arg0: i32) -> (i32, i32) {
    %c0_i32 = arith.constant 0 : i32
    %c0_i32_0 = arith.constant 0 : i32
    %c0_i32_1 = arith.constant 0 : i32
    return %c0_i32, %c0_i32_0 : i32, i32
  }
  func.func @transform_8(%arg0: i32) -> (i32, i32) {
    %c0_i32 = arith.constant 0 : i32
    %c0_i32_0 = arith.constant 0 : i32
    %c0_i32_1 = arith.constant 0 : i32
    return %c0_i32, %c0_i32_0 : i32, i32
  }
  func.func @transform_9(%arg0: i32) -> (i32, i32) {
    %c0_i32 = arith.constant 0 : i32
    %c0_i32_0 = arith.constant 0 : i32
    return %arg0, %c0_i32 : i32, i32
  }
}

</mosaic_0001>

<llo_original>
// kernel: fully_connected_forward.1
$region0: #{fully_connected_forward.1}
  #allocation0 [shape = 'u32[]', space=smem, size = 0x4, offset = 0x4, fixed_abs, tag = 'smem constant byte address 0x4 - core index']
  #allocation1 [shape = 'u32[144,128]{1,0:T(1,128)}', space=vmem, size = 0x12000, scoped, tag = 'internal scratch']
  %s0 = inlined_call_operand.vmem [shape: f32[8,128], index: 0, kind: input, shape index: {}]
  %s1 = inlined_call_operand.vmem [shape: bf16[128,128], index: 1, kind: input, shape index: {}]
  %s2 = inlined_call_operand.vmem [shape: f32[1,128], index: 2, kind: input, shape index: {}]
  %s3 = inlined_call_operand.vmem [shape: bf16[128,128], index: 3, kind: input, shape index: {}]
  %s4 = inlined_call_operand.vmem [shape: f32[1,128], index: 4, kind: input, shape index: {}]
  %s5 = inlined_call_operand.vmem [shape: f32[1,128], index: 5, kind: input, shape index: {}]
  %s6 = inlined_call_operand.vmem [shape: f32[1,128], index: 6, kind: input, shape index: {}]
  %s7 = inlined_call_operand.vmem [shape: bf16[128,128], index: 7, kind: input, shape index: {}]
  %s8 = inlined_call_operand.vmem [shape: f32[1,128], index: 8, kind: input, shape index: {}]
  %s9 = inlined_call_operand.hbm [shape: f32[8,128], index: 9, kind: output, shape index: {}]
  %s10 = sld [smem:[#allocation0]]
  $region46: #{fully_connected_forward.1} parent=0
    _
  %s12 = ssub.s32 1, %s10
  %s13 = scalar_select 0, %s12, %s10
  $region1: #{fully_connected_forward.1} parent=0
    #allocation2 [shape = 'u8[4096]{0}', space=vmem, size = 0x1000, scoped, tag = 'output window, operand 0, single buffered']
    #allocation3 [shape = 's32[1]{0}', space=sflag, size = 0x4, scoped, tag = 'scoped memory for fully_connected_forward.1']
    %14 = vsyncpa [#allocation3], 0
    // Predicated region
    $region2: #{fully_connected_forward.1} parent=1 // pred_check
      _
    $region3: #{fully_connected_forward.1} parent=1 // pred_check_branch
      %16 = sbr.rel (0) target = $region5
    $region4: #{fully_connected_forward.1} parent=1 // pred_region
      _
    $region5: #{fully_connected_forward.1} parent=1 // pred_fallthru
      _
    // Predicated region
    $region6: #{fully_connected_forward.1} parent=1 // pred_check
      _
    $region7: #{fully_connected_forward.1} parent=1 // pred_check_branch
      %18 = sbr.rel (0) target = $region9
    $region8: #{fully_connected_forward.1} parent=1 // pred_region
      _
    $region9: #{fully_connected_forward.1} parent=1 // pred_fallthru
      _
    // Predicated region
    $region10: #{fully_connected_forward.1} parent=1 // pred_check
      _
    $region11: #{fully_connected_forward.1} parent=1 // pred_check_branch
      %20 = sbr.rel (0) target = $region13
    $region12: #{fully_connected_forward.1} parent=1 // pred_region
      _
    $region13: #{fully_connected_forward.1} parent=1 // pred_fallthru
      _
    // Predicated region
    $region14: #{fully_connected_forward.1} parent=1 // pred_check
      _
    $region15: #{fully_connected_forward.1} parent=1 // pred_check_branch
      %22 = sbr.rel (0) target = $region17
    $region16: #{fully_connected_forward.1} parent=1 // pred_region
      _
    $region17: #{fully_connected_forward.1} parent=1 // pred_fallthru
      _
    // Predicated region
    $region18: #{fully_connected_forward.1} parent=1 // pred_check
      _
    $region19: #{fully_connected_forward.1} parent=1 // pred_check_branch
      %24 = sbr.rel (0) target = $region21
    $region20: #{fully_connected_forward.1} parent=1 // pred_region
      _
    $region21: #{fully_connected_forward.1} parent=1 // pred_fallthru
      _
    // Predicated region
    $region22: #{fully_connected_forward.1} parent=1 // pred_check
      _
    $region23: #{fully_connected_forward.1} parent=1 // pred_check_branch
      %26 = sbr.rel (0) target = $region25
    $region24: #{fully_connected_forward.1} parent=1 // pred_region
      _
    $region25: #{fully_connected_forward.1} parent=1 // pred_fallthru
      _
    // Predicated region
    $region26: #{fully_connected_forward.1} parent=1 // pred_check
      _
    $region27: #{fully_connected_forward.1} parent=1 // pred_check_branch
      %28 = sbr.rel (0) target = $region29
    $region28: #{fully_connected_forward.1} parent=1 // pred_region
      _
    $region29: #{fully_connected_forward.1} parent=1 // pred_fallthru
      _
    // Predicated region
    $region30: #{fully_connected_forward.1} parent=1 // pred_check
      _
    $region31: #{fully_connected_forward.1} parent=1 // pred_check_branch
      %30 = sbr.rel (0) target = $region33
    $region32: #{fully_connected_forward.1} parent=1 // pred_region
      _
    $region33: #{fully_connected_forward.1} parent=1 // pred_fallthru
      _
    // Predicated region
    $region34: #{fully_connected_forward.1} parent=1 // pred_check
      _
    $region35: #{fully_connected_forward.1} parent=1 // pred_check_branch
      %32 = sbr.rel (0) target = $region37
    $region36: #{fully_connected_forward.1} parent=1 // pred_region
      _
    $region37: #{fully_connected_forward.1} parent=1 // pred_fallthru
      _
    %v34 = vld [vmem:[%s0] sm:$0xff]
    %v35 = vpack.c.bf16 %v34, %v34
    %v36 = vld [vmem:[%s1] sm:$0xf]
    %v37 = vld [vmem:[%s1 + $0x4] sm:$0xf]
    %v38 = vld [vmem:[%s1 + $0x8] sm:$0xf]
    %v39 = vld [vmem:[%s1 + $0xc] sm:$0xf]
    %v40 = vld [vmem:[%s1 + $0x10] sm:$0xf]
    %v41 = vld [vmem:[%s1 + $0x14] sm:$0xf]
    %v42 = vld [vmem:[%s1 + $0x18] sm:$0xf]
    %v43 = vld [vmem:[%s1 + $0x1c] sm:$0xf]
    %v44 = vld [vmem:[%s1 + $0x20] sm:$0xf]
    %v45 = vld [vmem:[%s1 + $0x24] sm:$0xf]
    %v46 = vld [vmem:[%s1 + $0x28] sm:$0xf]
    %v47 = vld [vmem:[%s1 + $0x2c] sm:$0xf]
    %v48 = vld [vmem:[%s1 + $0x30] sm:$0xf]
    %v49 = vld [vmem:[%s1 + $0x34] sm:$0xf]
    %v50 = vld [vmem:[%s1 + $0x38] sm:$0xf]
    %v51 = vld [vmem:[%s1 + $0x3c] sm:$0xf]
    %v52 = vld [vmem:[%s2] sm:$0x1]
    %v54 = vlaneseq
    %v55 = vshrl.u32 %v54, 7
    %v56 = vsub.s32 0, %v55
    %v57 = vrot.slane %v52, %v56
    %v75 = vunpack.c.l.b16 %v36
    %v76 = vunpack.c.l.b16 %v37
    %v77 = vunpack.c.l.b16 %v38
    %v78 = vunpack.c.l.b16 %v39
    %v79 = vunpack.c.l.b16 %v40
    %v80 = vunpack.c.l.b16 %v41
    %v81 = vunpack.c.l.b16 %v42
    %v82 = vunpack.c.l.b16 %v43
    %v83 = vunpack.c.l.b16 %v44
    %v84 = vunpack.c.l.b16 %v45
    %v85 = vunpack.c.l.b16 %v46
    %v86 = vunpack.c.l.b16 %v47
    %v87 = vunpack.c.l.b16 %v48
    %v88 = vunpack.c.l.b16 %v49
    %v89 = vunpack.c.l.b16 %v50
    %v90 = vunpack.c.l.b16 %v51
    %v91 = vpack.c.b16 %v76, %v75
    %v92 = vpack.c.b16 %v78, %v77
    %v93 = vpack.c.b16 %v80, %v79
    %v94 = vpack.c.b16 %v82, %v81
    %v95 = vpack.c.b16 %v84, %v83
    %v96 = vpack.c.b16 %v86, %v85
    %v97 = vpack.c.b16 %v88, %v87
    %v98 = vpack.c.b16 %v90, %v89
    %107 = vmatprep.subr.bf16.mxu0 0
    %108 = vmatpush1.bf16.msra.mxu0 %v91
    %109 = vmatprep.subr.bf16.mxu0 0
    %110 = vmatpush1.bf16.msra.mxu0 %v92
    %111 = vmatprep.subr.bf16.mxu0 0
    %112 = vmatpush1.bf16.msra.mxu0 %v93
    %113 = vmatprep.subr.bf16.mxu0 0
    %114 = vmatpush1.bf16.msra.mxu0 %v94
    %115 = vmatprep.subr.bf16.mxu0 0
    %116 = vmatpush1.bf16.msra.mxu0 %v95
    %117 = vmatprep.subr.bf16.mxu0 0
    %118 = vmatpush1.bf16.msra.mxu0 %v96
    %119 = vmatprep.subr.bf16.mxu0 0
    %120 = vmatpush1.bf16.msra.mxu0 %v97
    %121 = vmatprep.subr.bf16.mxu0 0
    %122 = vmatpush1.bf16.msra.mxu0 %v98
    %123 = vmatprep.subr.bf16.mxu0 0
    %124 = vmatpush1.bf16.msra.mxu0 0
    %125 = vmatprep.subr.bf16.mxu0 0
    %126 = vmatpush1.bf16.msra.mxu0 0
    %127 = vmatprep.subr.bf16.mxu0 0
    %128 = vmatpush1.bf16.msra.mxu0 0
    %129 = vmatprep.subr.bf16.mxu0 0
    %130 = vmatpush1.bf16.msra.mxu0 0
    %131 = vmatprep.subr.bf16.mxu0 0
    %132 = vmatpush1.bf16.msra.mxu0 0
    %133 = vmatprep.subr.bf16.mxu0 0
    %134 = vmatpush1.bf16.msra.mxu0 0
    %135 = vmatprep.subr.bf16.mxu0 0
    %136 = vmatpush1.bf16.msra.mxu0 0
    %137 = vmatprep.subr.bf16.mxu0 0
    %138 = vmatpush1.bf16.msra.mxu0 0
    %139 = vmatprep.mubr.bf16.mxu0 0
    %140 = vmatmul.mubr.bf16.gmra.mrb[0].mxu0 %v35
    %v141 = vpop.f32.mrb[0].mxu0
    %v142 = vadd.f32 %v57, %v141
    %v143 = vpop.f32.mrb[0].mxu0
    %v144 = vpop.f32.mrb[0].mxu0
    %v145 = vpop.f32.mrb[0].mxu0
    %146 = vdwg.mxu0
    %v147 = vmax.f32 %v142, 0.0
    %v148 = vpack.c.bf16 %v147, %v147
    %v149 = vld [vmem:[%s3] sm:$0xf]
    %v150 = vld [vmem:[%s3 + $0x4] sm:$0xf]
    %v151 = vld [vmem:[%s3 + $0x8] sm:$0xf]
    %v152 = vld [vmem:[%s3 + $0xc] sm:$0xf]
    %v153 = vld [vmem:[%s3 + $0x10] sm:$0xf]
    %v154 = vld [vmem:[%s3 + $0x14] sm:$0xf]
    %v155 = vld [vmem:[%s3 + $0x18] sm:$0xf]
    %v156 = vld [vmem:[%s3 + $0x1c] sm:$0xf]
    %v157 = vld [vmem:[%s3 + $0x20] sm:$0xf]
    %v158 = vld [vmem:[%s3 + $0x24] sm:$0xf]
    %v159 = vld [vmem:[%s3 + $0x28] sm:$0xf]
    %v160 = vld [vmem:[%s3 + $0x2c] sm:$0xf]
    %v161 = vld [vmem:[%s3 + $0x30] sm:$0xf]
    %v162 = vld [vmem:[%s3 + $0x34] sm:$0xf]
    %v163 = vld [vmem:[%s3 + $0x38] sm:$0xf]
    %v164 = vld [vmem:[%s3 + $0x3c] sm:$0xf]
    %v165 = vld [vmem:[%s4] sm:$0x1]
    %v167 = vlaneseq
    %v168 = vshrl.u32 %v167, 7
    %v169 = vsub.s32 0, %v168
    %v170 = vrot.slane %v165, %v169
    %v188 = vunpack.c.l.b16 %v149
    %v189 = vunpack.c.l.b16 %v150
    %v190 = vunpack.c.l.b16 %v151
    %v191 = vunpack.c.l.b16 %v152
    %v192 = vunpack.c.l.b16 %v153
    %v193 = vunpack.c.l.b16 %v154
    %v194 = vunpack.c.l.b16 %v155
    %v195 = vunpack.c.l.b16 %v156
    %v196 = vunpack.c.l.b16 %v157
    %v197 = vunpack.c.l.b16 %v158
    %v198 = vunpack.c.l.b16 %v159
    %v199 = vunpack.c.l.b16 %v160
    %v200 = vunpack.c.l.b16 %v161
    %v201 = vunpack.c.l.b16 %v162
    %v202 = vunpack.c.l.b16 %v163
    %v203 = vunpack.c.l.b16 %v164
    %v204 = vpack.c.b16 %v189, %v188
    %v205 = vpack.c.b16 %v191, %v190
    %v206 = vpack.c.b16 %v193, %v192
    %v207 = vpack.c.b16 %v195, %v194
    %v208 = vpack.c.b16 %v197, %v196
    %v209 = vpack.c.b16 %v199, %v198
    %v210 = vpack.c.b16 %v201, %v200
    %v211 = vpack.c.b16 %v203, %v202
    %220 = vmatprep.subr.bf16.mxu0 0
    %221 = vmatpush1.bf16.msra.mxu0 %v204
    %222 = vmatprep.subr.bf16.mxu0 0
    %223 = vmatpush1.bf16.msra.mxu0 %v205
    %224 = vmatprep.subr.bf16.mxu0 0
    %225 = vmatpush1.bf16.msra.mxu0 %v206
    %226 = vmatprep.subr.bf16.mxu0 0
    %227 = vmatpush1.bf16.msra.mxu0 %v207
    %228 = vmatprep.subr.bf16.mxu0 0
    %229 = vmatpush1.bf16.msra.mxu0 %v208
    %230 = vmatprep.subr.bf16.mxu0 0
    %231 = vmatpush1.bf16.msra.mxu0 %v209
    %232 = vmatprep.subr.bf16.mxu0 0
    %233 = vmatpush1.bf16.msra.mxu0 %v210
    %234 = vmatprep.subr.bf16.mxu0 0
    %235 = vmatpush1.bf16.msra.mxu0 %v211
    %236 = vmatprep.subr.bf16.mxu0 0
    %237 = vmatpush1.bf16.msra.mxu0 0
    %238 = vmatprep.subr.bf16.mxu0 0
    %239 = vmatpush1.bf16.msra.mxu0 0
    %240 = vmatprep.subr.bf16.mxu0 0
    %241 = vmatpush1.bf16.msra.mxu0 0
    %242 = vmatprep.subr.bf16.mxu0 0
    %243 = vmatpush1.bf16.msra.mxu0 0
    %244 = vmatprep.subr.bf16.mxu0 0
    %245 = vmatpush1.bf16.msra.mxu0 0
    %246 = vmatprep.subr.bf16.mxu0 0
    %247 = vmatpush1.bf16.msra.mxu0 0
    %248 = vmatprep.subr.bf16.mxu0 0
    %249 = vmatpush1.bf16.msra.mxu0 0
    %250 = vmatprep.subr.bf16.mxu0 0
    %251 = vmatpush1.bf16.msra.mxu0 0
    %252 = vmatprep.mubr.bf16.mxu0 0
    %253 = vmatmul.mubr.bf16.gmra.mrb[0].mxu0 %v148
    %v254 = vpop.f32.mrb[0].mxu0
    %v255 = vadd.f32 %v170, %v254
    %v256 = vpop.f32.mrb[0].mxu0
    %v257 = vpop.f32.mrb[0].mxu0
    %v258 = vpop.f32.mrb[0].mxu0
    %259 = vdwg.mxu0
    %v260 = vadd.f32 %v34, %v255
    %261 = vadd.xlane.f32.xlu0 %v260
    %v262 = vpop.xlane.xlu0 %261
    %v263 = vmul.f32 %v262, 0.03125
    %v264 = vsub.f32 %v260, %v263
    %v265 = vlaneseq
    %v266 = vand.u32 %v265, 127
    %vm267 = vcmp.lt.s32.totalorder %v266, 32
    %v268 = vsel %vm267, %v264, 0.0
    %v269 = vmul.f32 %v268, %v268
    %270 = vadd.xlane.f32.xlu0 %v269
    %v271 = vpop.xlane.xlu0 %270
    %v272 = vmul.f32 %v271, 0.03125
    %v273 = vadd.f32 %v272, 1e-05
    %v274 = vrsqrt.pop %v273
    %v275 = vld [vmem:[%s5] sm:$0x1]
    %v277 = vlaneseq
    %v278 = vshrl.u32 %v277, 7
    %v279 = vsub.s32 0, %v278
    %v280 = vrot.slane %v275, %v279
    %v282 = vmul.f32 %v274, %v280
    %v283 = vmul.f32 %v268, %v282
    %v284 = vld [vmem:[%s6] sm:$0x1]
    %v286 = vlaneseq
    %v287 = vshrl.u32 %v286, 7
    %v288 = vsub.s32 0, %v287
    %v289 = vrot.slane %v284, %v288
    %v291 = vadd.f32 %v283, %v289
    %v292 = vpack.c.bf16 %v291, %v291
    %v293 = vld [vmem:[%s7] sm:$0xf]
    %v294 = vld [vmem:[%s7 + $0x4] sm:$0xf]
    %v295 = vld [vmem:[%s7 + $0x8] sm:$0xf]
    %v296 = vld [vmem:[%s7 + $0xc] sm:$0xf]
    %v297 = vld [vmem:[%s7 + $0x10] sm:$0xf]
    %v298 = vld [vmem:[%s7 + $0x14] sm:$0xf]
    %v299 = vld [vmem:[%s7 + $0x18] sm:$0xf]
    %v300 = vld [vmem:[%s7 + $0x1c] sm:$0xf]
    %v301 = vld [vmem:[%s7 + $0x20] sm:$0xf]
    %v302 = vld [vmem:[%s7 + $0x24] sm:$0xf]
    %v303 = vld [vmem:[%s7 + $0x28] sm:$0xf]
    %v304 = vld [vmem:[%s7 + $0x2c] sm:$0xf]
    %v305 = vld [vmem:[%s7 + $0x30] sm:$0xf]
    %v306 = vld [vmem:[%s7 + $0x34] sm:$0xf]
    %v307 = vld [vmem:[%s7 + $0x38] sm:$0xf]
    %v308 = vld [vmem:[%s7 + $0x3c] sm:$0xf]
    %v309 = vld [vmem:[%s8] sm:$0x1]
    %v311 = vlaneseq
    %v312 = vshrl.u32 %v311, 7
    %v313 = vsub.s32 0, %v312
    %v314 = vrot.slane %v309, %v313
    %v332 = vunpack.c.l.b16 %v293
    %v333 = vunpack.c.l.b16 %v294
    %v334 = vunpack.c.l.b16 %v295
    %v335 = vunpack.c.l.b16 %v296
    %v336 = vunpack.c.l.b16 %v297
    %v337 = vunpack.c.l.b16 %v298
    %v338 = vunpack.c.l.b16 %v299
    %v339 = vunpack.c.l.b16 %v300
    %v340 = vunpack.c.l.b16 %v301
    %v341 = vunpack.c.l.b16 %v302
    %v342 = vunpack.c.l.b16 %v303
    %v343 = vunpack.c.l.b16 %v304
    %v344 = vunpack.c.l.b16 %v305
    %v345 = vunpack.c.l.b16 %v306
    %v346 = vunpack.c.l.b16 %v307
    %v347 = vunpack.c.l.b16 %v308
    %v348 = vpack.c.b16 %v333, %v332
    %v349 = vpack.c.b16 %v335, %v334
    %v350 = vpack.c.b16 %v337, %v336
    %v351 = vpack.c.b16 %v339, %v338
    %v352 = vpack.c.b16 %v341, %v340
    %v353 = vpack.c.b16 %v343, %v342
    %v354 = vpack.c.b16 %v345, %v344
    %v355 = vpack.c.b16 %v347, %v346
    %364 = vmatprep.subr.bf16.mxu0 0
    %365 = vmatpush1.bf16.msra.mxu0 %v348
    %366 = vmatprep.subr.bf16.mxu0 0
    %367 = vmatpush1.bf16.msra.mxu0 %v349
    %368 = vmatprep.subr.bf16.mxu0 0
    %369 = vmatpush1.bf16.msra.mxu0 %v350
    %370 = vmatprep.subr.bf16.mxu0 0
    %371 = vmatpush1.bf16.msra.mxu0 %v351
    %372 = vmatprep.subr.bf16.mxu0 0
    %373 = vmatpush1.bf16.msra.mxu0 %v352
    %374 = vmatprep.subr.bf16.mxu0 0
    %375 = vmatpush1.bf16.msra.mxu0 %v353
    %376 = vmatprep.subr.bf16.mxu0 0
    %377 = vmatpush1.bf16.msra.mxu0 %v354
    %378 = vmatprep.subr.bf16.mxu0 0
    %379 = vmatpush1.bf16.msra.mxu0 %v355
    %380 = vmatprep.subr.bf16.mxu0 0
    %381 = vmatpush1.bf16.msra.mxu0 0
    %382 = vmatprep.subr.bf16.mxu0 0
    %383 = vmatpush1.bf16.msra.mxu0 0
    %384 = vmatprep.subr.bf16.mxu0 0
    %385 = vmatpush1.bf16.msra.mxu0 0
    %386 = vmatprep.subr.bf16.mxu0 0
    %387 = vmatpush1.bf16.msra.mxu0 0
    %388 = vmatprep.subr.bf16.mxu0 0
    %389 = vmatpush1.bf16.msra.mxu0 0
    %390 = vmatprep.subr.bf16.mxu0 0
    %391 = vmatpush1.bf16.msra.mxu0 0
    %392 = vmatprep.subr.bf16.mxu0 0
    %393 = vmatpush1.bf16.msra.mxu0 0
    %394 = vmatprep.subr.bf16.mxu0 0
    %395 = vmatpush1.bf16.msra.mxu0 0
    %396 = vmatprep.mubr.bf16.mxu0 0
    %397 = vmatmul.mubr.bf16.gmra.mrb[0].mxu0 %v292
    %v398 = vpop.f32.mrb[0].mxu0
    %v399 = vadd.f32 %v314, %v398
    %v400 = vpop.f32.mrb[0].mxu0
    %v401 = vpop.f32.mrb[0].mxu0
    %v402 = vpop.f32.mrb[0].mxu0
    %403 = vdwg.mxu0
    %404 = vst [vmem:[#allocation2] sm:$0xff] %v399
    // Predicated region
    $region38: #{fully_connected_forward.1} parent=1 // pred_check
      _
    $region39: #{fully_connected_forward.1} parent=1 // pred_check_branch
      %406 = sbr.rel (0) target = $region41
    $region40: #{fully_connected_forward.1} parent=1 // pred_region
      %s408 = ssub.s32 128, 128
      %409 = vsyncadd [#allocation3], %s408
      %s411 = sshll.u32 [#allocation2], 4
      %s412 = int_to_ptr.vmem [resolvable:$true] %s411
      %414 = dma.vmem_to_hbm [thread:$0]  %s412, 128, %s9, [#allocation3]
    $region41: #{fully_connected_forward.1} parent=1 // pred_fallthru
      _
    // Predicated region
    $region42: #{fully_connected_forward.1} parent=1 // pred_check
      _
    $region43: #{fully_connected_forward.1} parent=1 // pred_check_branch
      %416 = sbr.rel (0) target = $region45
    $region44: #{fully_connected_forward.1} parent=1 // pred_region
      %417 = dma.done [#allocation3], 128
    $region45: #{fully_connected_forward.1} parent=1 // pred_fallthru
      _
    %418 = vsyncpa [#allocation3], 1

</llo_original>
